<compile_context>
chip_gen: v5e
topology: v5e:2x2
jax: 0.10.0
libtpu: 0.0.40
codegen_flags: <defaults>
</compile_context>

<pallas_src>
import functools

import jax
import jax.numpy as jnp
import numpy as np
from jax.experimental import pallas as pl
from jax.experimental.pallas import tpu as pltpu

HIDDEN_SHAPE_BODY = 64
HIDDEN_SHAPE_BODY_OUT = 64
HIDDEN_SHAPE_LSTM = 32
HIDDEN_SHAPE_POLICY = 32
HIDDEN_SHAPE_VALUE = 32

# head block of the fused output slab: 64 fused-head lanes + 2*H state lanes = 128
_HEAD_PAD = 128 - 2 * HIDDEN_SHAPE_LSTM


# ---------------------------------------------------------------------------
# Pallas kernel: hoisted body-MLP/gate precompute + unrolled masked LSTM
# recurrence + fused policy/value heads, all in VMEM, one lane-dense output.
# ---------------------------------------------------------------------------
def _pv_lstm_kernel(x_ref, len_ref, h0_ref, c0_ref,
                    w1_ref, b1_ref, w2_ref, b2_ref,
                    wih_ref, whh_ref, bias_ref,
                    wh1_ref, bh1_ref, wh2_ref, bh2_ref,
                    out_ref):
    B, H = h0_ref.shape
    T = x_ref.shape[0] // B

    lengths = len_ref[...]          # [B, 1] int32
    whh = whh_ref[...]              # [H, 4H]

    # ---- hoisted input-side compute: body MLP -> x-side gate matmul (+bias)
    # as one batched matmul chain over all T*B rows.  Padded timesteps are
    # computed too but masked out of the recurrence below (PackedSequence
    # semantics preserved).
    xb = x_ref[...]                                                   # [T*B, F]
    fc = jnp.maximum(
        jnp.dot(xb, w1_ref[...], preferred_element_type=jnp.float32)
        + b1_ref[...], 0.0)
    fc = (jnp.dot(fc, w2_ref[...], preferred_element_type=jnp.float32)
          + b2_ref[...])
    gates_x = (jnp.dot(fc, wih_ref[...], preferred_element_type=jnp.float32)
               + bias_ref[...])                                       # [T*B, 4H]

    # ---- serial LSTM recurrence, fully unrolled at trace time (T static).
    h = h0_ref[...]
    c = c0_ref[...]
    for t in range(T):
        gates = gates_x[t * B:(t + 1) * B, :] + jnp.dot(
            h, whh, preferred_element_type=jnp.float32)               # [B, 4H]
        # full 128-lane-wide nonlinearities, slice per gate afterwards.
        sig = jax.nn.sigmoid(gates)
        th = jnp.tanh(gates)
        i_g = sig[:, 0 * H:1 * H]
        f_g = sig[:, 1 * H:2 * H]
        g_g = th[:, 2 * H:3 * H]
        o_g = sig[:, 3 * H:4 * H]
        c_new = f_g * c + i_g * g_g
        h_new = o_g * jnp.tanh(c_new)
        # PackedSequence semantics: only rows with t < length advance.
        mask = t < lengths                                            # [B, 1]
        h = jnp.where(mask, h_new, h)
        c = jnp.where(mask, c_new, c)

    # ---- fused policy/value heads: one ReLU matmul + one block-diag matmul.
    ph = jnp.maximum(
        jnp.dot(h, wh1_ref[...], preferred_element_type=jnp.float32)
        + bh1_ref[...], 0.0)                                          # [B, 64]
    head = (jnp.dot(ph, wh2_ref[...], preferred_element_type=jnp.float32)
            + bh2_ref[...])                                           # [B, 64]

    # single lane-dense [B, 128] output slab: [policy | value | pad | h_n | c_n]
    out_ref[...] = jnp.concatenate([head, h, c], axis=-1)


# ---------------------------------------------------------------------------
# Wrapper
# ---------------------------------------------------------------------------
@functools.partial(jax.jit, static_argnames=("num_actions",))
def policy_value_lstm_forward(x, lengths, h0, c0, params, *, num_actions):
    """x: [T, B, num_inputs] f32, lengths: [B] int32 (sorted descending),
    h0/c0: [1, B, HIDDEN_SHAPE_LSTM].  Returns (policy, value, (h_n, c_n))."""
    T, B, F = x.shape
    H = HIDDEN_SHAPE_LSTM
    PH = HIDDEN_SHAPE_POLICY
    assert num_actions + 1 <= _HEAD_PAD

    # fused head weights (bit-equivalent block-diagonal construction)
    w_h1 = jnp.concatenate([params["wp1"], params["wv1"]], axis=1)     # [H, 64]
    b_h1 = jnp.concatenate([params["bp1"], params["bv1"]], axis=1)     # [1, 64]
    w_h2 = jnp.zeros((PH + HIDDEN_SHAPE_VALUE, _HEAD_PAD), jnp.float32)
    w_h2 = w_h2.at[:PH, :num_actions].set(params["wp2"])
    w_h2 = w_h2.at[PH:, num_actions:num_actions + 1].set(params["wv2"])
    b_h2 = jnp.zeros((1, _HEAD_PAD), jnp.float32)
    b_h2 = b_h2.at[:, :num_actions].set(params["bp2"])
    b_h2 = b_h2.at[:, num_actions:num_actions + 1].set(params["bv2"])

    bias = params["b_ih"] + params["b_hh"]                             # [1, 4H]

    inputs = (
        x.reshape(T * B, F).astype(jnp.float32),
        lengths.reshape(B, 1).astype(jnp.int32),
        h0.reshape(B, H).astype(jnp.float32),
        c0.reshape(B, H).astype(jnp.float32),
        params["w1"], params["b1"], params["w2"], params["b2"],
        params["w_ih"], params["w_hh"], bias,
        w_h1, b_h1, w_h2, b_h2,
    )

    out_width = _HEAD_PAD + 2 * H                                      # 128
    vmem = pl.BlockSpec(memory_space=pltpu.MemorySpace.VMEM)
    out = pl.pallas_call(
        _pv_lstm_kernel,
        out_shape=jax.ShapeDtypeStruct((B, out_width), jnp.float32),
        in_specs=[vmem] * len(inputs),
        out_specs=vmem,
    )(*inputs)

    policy = out[:, :num_actions]
    value = out[:, num_actions:num_actions + 1]
    h_n = out[:, _HEAD_PAD:_HEAD_PAD + H].reshape(1, B, H)
    c_n = out[:, _HEAD_PAD + H:_HEAD_PAD + 2 * H].reshape(1, B, H)
    return policy, value, (h_n, c_n)


# ---------------------------------------------------------------------------
# Deterministic parameter init (mimics PyTorch's uniform(-1/sqrt(fan), +...))
# ---------------------------------------------------------------------------
def init_params(key, num_inputs, num_actions):
    def lin(key, fan_in, fan_out):
        kw, kb = jax.random.split(key)
        bound = 1.0 / np.sqrt(fan_in)
        w = jax.random.uniform(kw, (fan_in, fan_out), jnp.float32, -bound, bound)
        b = jax.random.uniform(kb, (1, fan_out), jnp.float32, -bound, bound)
        return w, b

    keys = jax.random.split(key, 8)
    H = HIDDEN_SHAPE_LSTM
    params = {}
    params["w1"], params["b1"] = lin(keys[0], num_inputs, HIDDEN_SHAPE_BODY)
    params["w2"], params["b2"] = lin(keys[1], HIDDEN_SHAPE_BODY, HIDDEN_SHAPE_BODY_OUT)
    # LSTM weights: [in, 4H] with PyTorch gate order (i, f, g, o); init 1/sqrt(H)
    bound = 1.0 / np.sqrt(H)
    k0, k1, k2, k3 = jax.random.split(keys[2], 4)
    params["w_ih"] = jax.random.uniform(k0, (HIDDEN_SHAPE_BODY_OUT, 4 * H),
                                        jnp.float32, -bound, bound)
    params["w_hh"] = jax.random.uniform(k1, (H, 4 * H), jnp.float32, -bound, bound)
    params["b_ih"] = jax.random.uniform(k2, (1, 4 * H), jnp.float32, -bound, bound)
    params["b_hh"] = jax.random.uniform(k3, (1, 4 * H), jnp.float32, -bound, bound)
    params["wp1"], params["bp1"] = lin(keys[3], H, HIDDEN_SHAPE_POLICY)
    params["wp2"], params["bp2"] = lin(keys[4], HIDDEN_SHAPE_POLICY, num_actions)
    params["wv1"], params["bv1"] = lin(keys[5], H, HIDDEN_SHAPE_VALUE)
    params["wv2"], params["bv2"] = lin(keys[6], HIDDEN_SHAPE_VALUE, 1)
    return params


# ---------------------------------------------------------------------------
# Pure-JAX reference (same semantics) for a correctness check.
# ---------------------------------------------------------------------------
def reference_forward(x, lengths, h0, c0, params):
    T, B, _ = x.shape
    H = HIDDEN_SHAPE_LSTM
    h = h0.reshape(B, H)
    c = c0.reshape(B, H)
    bias = params["b_ih"] + params["b_hh"]
    for t in range(T):
        xt = x[t]
        fc = jnp.maximum(xt @ params["w1"] + params["b1"], 0.0)
        fc = fc @ params["w2"] + params["b2"]
        gates = fc @ params["w_ih"] + h @ params["w_hh"] + bias
        i_g = jax.nn.sigmoid(gates[:, 0 * H:1 * H])
        f_g = jax.nn.sigmoid(gates[:, 1 * H:2 * H])
        g_g = jnp.tanh(gates[:, 2 * H:3 * H])
        o_g = jax.nn.sigmoid(gates[:, 3 * H:4 * H])
        c_new = f_g * c + i_g * g_g
        h_new = o_g * jnp.tanh(c_new)
        mask = (t < lengths).reshape(B, 1)
        h = jnp.where(mask, h_new, h)
        c = jnp.where(mask, c_new, c)
    p = jnp.maximum(h @ params["wp1"] + params["bp1"], 0.0)
    policy = p @ params["wp2"] + params["bp2"]
    v = jnp.maximum(h @ params["wv1"] + params["bv1"], 0.0)
    value = v @ params["wv2"] + params["bv2"]
    return policy, value, (h.reshape(1, B, H), c.reshape(1, B, H))


if __name__ == "__main__":
    num_inputs = 16
    num_actions = 5
    T, B = 8, 2

    key = jax.random.PRNGKey(0)
    kp, kx, kh, kc = jax.random.split(key, 4)

    params = init_params(kp, num_inputs, num_actions)
    x = jax.random.normal(kx, (T, B, num_inputs), jnp.float32)
    # PackedSequence-style variable lengths (sorted descending).
    lengths = jnp.array([8, 5], dtype=jnp.int32)
    h0 = jax.random.normal(kh, (1, B, HIDDEN_SHAPE_LSTM), jnp.float32)
    c0 = jax.random.normal(kc, (1, B, HIDDEN_SHAPE_LSTM), jnp.float32)

    policy, value, (h_n, c_n) = policy_value_lstm_forward(
        x, lengths, h0, c0, params, num_actions=num_actions)
    jax.block_until_ready((policy, value, h_n, c_n))

    # Cross-check against plain-JAX reference.
    p_ref, v_ref, (h_ref, c_ref) = reference_forward(x, lengths, h0, c0, params)
    np.testing.assert_allclose(np.asarray(policy), np.asarray(p_ref), rtol=1e-5, atol=1e-5)
    np.testing.assert_allclose(np.asarray(value), np.asarray(v_ref), rtol=1e-5, atol=1e-5)
    np.testing.assert_allclose(np.asarray(h_n), np.asarray(h_ref), rtol=1e-5, atol=1e-5)
    np.testing.assert_allclose(np.asarray(c_n), np.asarray(c_ref), rtol=1e-5, atol=1e-5)

    assert policy.shape == (B, num_actions)
    assert value.shape == (B, 1)
    assert h_n.shape == (1, B, HIDDEN_SHAPE_LSTM)
    assert c_n.shape == (1, B, HIDDEN_SHAPE_LSTM)

    print("KERNEL_OK")
</pallas_src>

<mosaic_0001>
module attributes {stable_mosaic.version = 11 : i64} {
  func.func @_pv_lstm_kernel(%arg0: memref<16x16xf32, #tpu.memory_space<vmem>>, %arg1: memref<2x1xi32, #tpu.memory_space<vmem>>, %arg2: memref<2x32xf32, #tpu.memory_space<vmem>>, %arg3: memref<2x32xf32, #tpu.memory_space<vmem>>, %arg4: memref<16x64xf32, #tpu.memory_space<vmem>>, %arg5: memref<1x64xf32, #tpu.memory_space<vmem>>, %arg6: memref<64x64xf32, #tpu.memory_space<vmem>>, %arg7: memref<1x64xf32, #tpu.memory_space<vmem>>, %arg8: memref<64x128xf32, #tpu.memory_space<vmem>>, %arg9: memref<32x128xf32, #tpu.memory_space<vmem>>, %arg10: memref<1x128xf32, #tpu.memory_space<vmem>>, %arg11: memref<32x64xf32, #tpu.memory_space<vmem>>, %arg12: memref<1x64xf32, #tpu.memory_space<vmem>>, %arg13: memref<64x64xf32, #tpu.memory_space<vmem>>, %arg14: memref<1x64xf32, #tpu.memory_space<vmem>>, %arg15: memref<2x128xf32, #tpu.memory_space<vmem>>) attributes {dimension_semantics = [], scalar_prefetch = 0 : i64, scratch_operands = 0 : i64, tpu.core_type = #tpu.core_type<tc>} {
    %c0 = arith.constant 0 : index
    %c0_0 = arith.constant 0 : index
    %0 = vector.load %arg1[%c0, %c0_0] : memref<2x1xi32, #tpu.memory_space<vmem>>, vector<2x1xi32>
    %c0_1 = arith.constant 0 : index
    %c0_2 = arith.constant 0 : index
    %1 = vector.load %arg9[%c0_1, %c0_2] : memref<32x128xf32, #tpu.memory_space<vmem>>, vector<32x128xf32>
    %c0_3 = arith.constant 0 : index
    %c0_4 = arith.constant 0 : index
    %2 = vector.load %arg0[%c0_3, %c0_4] : memref<16x16xf32, #tpu.memory_space<vmem>>, vector<16x16xf32>
    %c0_5 = arith.constant 0 : index
    %c0_6 = arith.constant 0 : index
    %3 = vector.load %arg4[%c0_5, %c0_6] : memref<16x64xf32, #tpu.memory_space<vmem>>, vector<16x64xf32>
    %cst = arith.constant dense<0.000000e+00> : vector<16x64xf32>
    %4 = tpu.matmul %2, %3, %cst {dimension_numbers = #tpu.dot_dimension_numbers<[1], [0], [0], [1], [0, 0, 1, 1], [], []>} : vector<16x16xf32>, vector<16x64xf32>, vector<16x64xf32> -> vector<16x64xf32>
    %c0_7 = arith.constant 0 : index
    %c0_8 = arith.constant 0 : index
    %5 = vector.load %arg5[%c0_7, %c0_8] : memref<1x64xf32, #tpu.memory_space<vmem>>, vector<1x64xf32>
    %6 = vector.broadcast %5 : vector<1x64xf32> to vector<16x64xf32>
    %7 = arith.addf %4, %6 : vector<16x64xf32>
    %cst_9 = arith.constant 0.000000e+00 : f32
    %8 = vector.broadcast %cst_9 : f32 to vector<16x64xf32>
    %9 = arith.maximumf %7, %8 : vector<16x64xf32>
    %c0_10 = arith.constant 0 : index
    %c0_11 = arith.constant 0 : index
    %10 = vector.load %arg6[%c0_10, %c0_11] : memref<64x64xf32, #tpu.memory_space<vmem>>, vector<64x64xf32>
    %cst_12 = arith.constant dense<0.000000e+00> : vector<16x64xf32>
    %11 = tpu.matmul %9, %10, %cst_12 {dimension_numbers = #tpu.dot_dimension_numbers<[1], [0], [0], [1], [0, 0, 1, 1], [], []>} : vector<16x64xf32>, vector<64x64xf32>, vector<16x64xf32> -> vector<16x64xf32>
    %c0_13 = arith.constant 0 : index
    %c0_14 = arith.constant 0 : index
    %12 = vector.load %arg7[%c0_13, %c0_14] : memref<1x64xf32, #tpu.memory_space<vmem>>, vector<1x64xf32>
    %13 = vector.broadcast %12 : vector<1x64xf32> to vector<16x64xf32>
    %14 = arith.addf %11, %13 : vector<16x64xf32>
    %c0_15 = arith.constant 0 : index
    %c0_16 = arith.constant 0 : index
    %15 = vector.load %arg8[%c0_15, %c0_16] : memref<64x128xf32, #tpu.memory_space<vmem>>, vector<64x128xf32>
    %cst_17 = arith.constant dense<0.000000e+00> : vector<16x128xf32>
    %16 = tpu.matmul %14, %15, %cst_17 {dimension_numbers = #tpu.dot_dimension_numbers<[1], [0], [0], [1], [0, 0, 1, 1], [], []>} : vector<16x64xf32>, vector<64x128xf32>, vector<16x128xf32> -> vector<16x128xf32>
    %c0_18 = arith.constant 0 : index
    %c0_19 = arith.constant 0 : index
    %17 = vector.load %arg10[%c0_18, %c0_19] : memref<1x128xf32, #tpu.memory_space<vmem>>, vector<1x128xf32>
    %18 = vector.broadcast %17 : vector<1x128xf32> to vector<16x128xf32>
    %19 = arith.addf %16, %18 : vector<16x128xf32>
    %c0_20 = arith.constant 0 : index
    %c0_21 = arith.constant 0 : index
    %20 = vector.load %arg2[%c0_20, %c0_21] : memref<2x32xf32, #tpu.memory_space<vmem>>, vector<2x32xf32>
    %c0_22 = arith.constant 0 : index
    %c0_23 = arith.constant 0 : index
    %21 = vector.load %arg3[%c0_22, %c0_23] : memref<2x32xf32, #tpu.memory_space<vmem>>, vector<2x32xf32>
    %22 = vector.extract_strided_slice %19 {offsets = [0, 0], sizes = [2, 128], strides = [1, 1]} : vector<16x128xf32> to vector<2x128xf32>
    %cst_24 = arith.constant dense<0.000000e+00> : vector<2x128xf32>
    %23 = tpu.matmul %20, %1, %cst_24 {dimension_numbers = #tpu.dot_dimension_numbers<[1], [0], [0], [1], [0, 0, 1, 1], [], []>} : vector<2x32xf32>, vector<32x128xf32>, vector<2x128xf32> -> vector<2x128xf32>
    %24 = arith.addf %22, %23 : vector<2x128xf32>
    %25 = arith.negf %24 : vector<2x128xf32>
    %26 = math.exp %25 : vector<2x128xf32>
    %cst_25 = arith.constant 1.000000e+00 : f32
    %27 = vector.broadcast %cst_25 : f32 to vector<2x128xf32>
    %28 = arith.addf %27, %26 : vector<2x128xf32>
    %29 = arith.divf %27, %28 : vector<2x128xf32>
    %30 = math.tanh %24 : vector<2x128xf32>
    %31 = vector.extract_strided_slice %29 {offsets = [0, 0], sizes = [2, 32], strides = [1, 1]} : vector<2x128xf32> to vector<2x32xf32>
    %32 = vector.extract_strided_slice %29 {offsets = [0, 32], sizes = [2, 32], strides = [1, 1]} : vector<2x128xf32> to vector<2x32xf32>
    %33 = vector.extract_strided_slice %30 {offsets = [0, 64], sizes = [2, 32], strides = [1, 1]} : vector<2x128xf32> to vector<2x32xf32>
    %34 = vector.extract_strided_slice %29 {offsets = [0, 96], sizes = [2, 32], strides = [1, 1]} : vector<2x128xf32> to vector<2x32xf32>
    %35 = arith.mulf %32, %21 : vector<2x32xf32>
    %36 = arith.mulf %31, %33 : vector<2x32xf32>
    %37 = arith.addf %35, %36 : vector<2x32xf32>
    %38 = math.tanh %37 : vector<2x32xf32>
    %39 = arith.mulf %34, %38 : vector<2x32xf32>
    %c0_i32 = arith.constant 0 : i32
    %40 = vector.broadcast %c0_i32 : i32 to vector<2x1xi32>
    %41 = arith.cmpi sgt, %0, %40 : vector<2x1xi32>
    %42 = vector.shape_cast %41 : vector<2x1xi1> to vector<2x1xi1>
    %43 = vector.broadcast %42 : vector<2x1xi1> to vector<2x32xi1>
    %44 = arith.select %43, %39, %20 : vector<2x32xi1>, vector<2x32xf32>
    %45 = vector.shape_cast %41 : vector<2x1xi1> to vector<2x1xi1>
    %46 = vector.broadcast %45 : vector<2x1xi1> to vector<2x32xi1>
    %47 = arith.select %46, %37, %21 : vector<2x32xi1>, vector<2x32xf32>
    %48 = vector.extract_strided_slice %19 {offsets = [2, 0], sizes = [2, 128], strides = [1, 1]} : vector<16x128xf32> to vector<2x128xf32>
    %cst_26 = arith.constant dense<0.000000e+00> : vector<2x128xf32>
    %49 = tpu.matmul %44, %1, %cst_26 {dimension_numbers = #tpu.dot_dimension_numbers<[1], [0], [0], [1], [0, 0, 1, 1], [], []>} : vector<2x32xf32>, vector<32x128xf32>, vector<2x128xf32> -> vector<2x128xf32>
    %50 = arith.addf %48, %49 : vector<2x128xf32>
    %51 = arith.negf %50 : vector<2x128xf32>
    %52 = math.exp %51 : vector<2x128xf32>
    %cst_27 = arith.constant 1.000000e+00 : f32
    %53 = vector.broadcast %cst_27 : f32 to vector<2x128xf32>
    %54 = arith.addf %53, %52 : vector<2x128xf32>
    %55 = arith.divf %53, %54 : vector<2x128xf32>
    %56 = math.tanh %50 : vector<2x128xf32>
    %57 = vector.extract_strided_slice %55 {offsets = [0, 0], sizes = [2, 32], strides = [1, 1]} : vector<2x128xf32> to vector<2x32xf32>
    %58 = vector.extract_strided_slice %55 {offsets = [0, 32], sizes = [2, 32], strides = [1, 1]} : vector<2x128xf32> to vector<2x32xf32>
    %59 = vector.extract_strided_slice %56 {offsets = [0, 64], sizes = [2, 32], strides = [1, 1]} : vector<2x128xf32> to vector<2x32xf32>
    %60 = vector.extract_strided_slice %55 {offsets = [0, 96], sizes = [2, 32], strides = [1, 1]} : vector<2x128xf32> to vector<2x32xf32>
    %61 = arith.mulf %58, %47 : vector<2x32xf32>
    %62 = arith.mulf %57, %59 : vector<2x32xf32>
    %63 = arith.addf %61, %62 : vector<2x32xf32>
    %64 = math.tanh %63 : vector<2x32xf32>
    %65 = arith.mulf %60, %64 : vector<2x32xf32>
    %c1_i32 = arith.constant 1 : i32
    %66 = vector.broadcast %c1_i32 : i32 to vector<2x1xi32>
    %67 = arith.cmpi sgt, %0, %66 : vector<2x1xi32>
    %68 = vector.shape_cast %67 : vector<2x1xi1> to vector<2x1xi1>
    %69 = vector.broadcast %68 : vector<2x1xi1> to vector<2x32xi1>
    %70 = arith.select %69, %65, %44 : vector<2x32xi1>, vector<2x32xf32>
    %71 = vector.shape_cast %67 : vector<2x1xi1> to vector<2x1xi1>
    %72 = vector.broadcast %71 : vector<2x1xi1> to vector<2x32xi1>
    %73 = arith.select %72, %63, %47 : vector<2x32xi1>, vector<2x32xf32>
    %74 = vector.extract_strided_slice %19 {offsets = [4, 0], sizes = [2, 128], strides = [1, 1]} : vector<16x128xf32> to vector<2x128xf32>
    %cst_28 = arith.constant dense<0.000000e+00> : vector<2x128xf32>
    %75 = tpu.matmul %70, %1, %cst_28 {dimension_numbers = #tpu.dot_dimension_numbers<[1], [0], [0], [1], [0, 0, 1, 1], [], []>} : vector<2x32xf32>, vector<32x128xf32>, vector<2x128xf32> -> vector<2x128xf32>
    %76 = arith.addf %74, %75 : vector<2x128xf32>
    %77 = arith.negf %76 : vector<2x128xf32>
    %78 = math.exp %77 : vector<2x128xf32>
    %cst_29 = arith.constant 1.000000e+00 : f32
    %79 = vector.broadcast %cst_29 : f32 to vector<2x128xf32>
    %80 = arith.addf %79, %78 : vector<2x128xf32>
    %81 = arith.divf %79, %80 : vector<2x128xf32>
    %82 = math.tanh %76 : vector<2x128xf32>
    %83 = vector.extract_strided_slice %81 {offsets = [0, 0], sizes = [2, 32], strides = [1, 1]} : vector<2x128xf32> to vector<2x32xf32>
    %84 = vector.extract_strided_slice %81 {offsets = [0, 32], sizes = [2, 32], strides = [1, 1]} : vector<2x128xf32> to vector<2x32xf32>
    %85 = vector.extract_strided_slice %82 {offsets = [0, 64], sizes = [2, 32], strides = [1, 1]} : vector<2x128xf32> to vector<2x32xf32>
    %86 = vector.extract_strided_slice %81 {offsets = [0, 96], sizes = [2, 32], strides = [1, 1]} : vector<2x128xf32> to vector<2x32xf32>
    %87 = arith.mulf %84, %73 : vector<2x32xf32>
    %88 = arith.mulf %83, %85 : vector<2x32xf32>
    %89 = arith.addf %87, %88 : vector<2x32xf32>
    %90 = math.tanh %89 : vector<2x32xf32>
    %91 = arith.mulf %86, %90 : vector<2x32xf32>
    %c2_i32 = arith.constant 2 : i32
    %92 = vector.broadcast %c2_i32 : i32 to vector<2x1xi32>
    %93 = arith.cmpi sgt, %0, %92 : vector<2x1xi32>
    %94 = vector.shape_cast %93 : vector<2x1xi1> to vector<2x1xi1>
    %95 = vector.broadcast %94 : vector<2x1xi1> to vector<2x32xi1>
    %96 = arith.select %95, %91, %70 : vector<2x32xi1>, vector<2x32xf32>
    %97 = vector.shape_cast %93 : vector<2x1xi1> to vector<2x1xi1>
    %98 = vector.broadcast %97 : vector<2x1xi1> to vector<2x32xi1>
    %99 = arith.select %98, %89, %73 : vector<2x32xi1>, vector<2x32xf32>
    %100 = vector.extract_strided_slice %19 {offsets = [6, 0], sizes = [2, 128], strides = [1, 1]} : vector<16x128xf32> to vector<2x128xf32>
    %cst_30 = arith.constant dense<0.000000e+00> : vector<2x128xf32>
    %101 = tpu.matmul %96, %1, %cst_30 {dimension_numbers = #tpu.dot_dimension_numbers<[1], [0], [0], [1], [0, 0, 1, 1], [], []>} : vector<2x32xf32>, vector<32x128xf32>, vector<2x128xf32> -> vector<2x128xf32>
    %102 = arith.addf %100, %101 : vector<2x128xf32>
    %103 = arith.negf %102 : vector<2x128xf32>
    %104 = math.exp %103 : vector<2x128xf32>
    %cst_31 = arith.constant 1.000000e+00 : f32
    %105 = vector.broadcast %cst_31 : f32 to vector<2x128xf32>
    %106 = arith.addf %105, %104 : vector<2x128xf32>
    %107 = arith.divf %105, %106 : vector<2x128xf32>
    %108 = math.tanh %102 : vector<2x128xf32>
    %109 = vector.extract_strided_slice %107 {offsets = [0, 0], sizes = [2, 32], strides = [1, 1]} : vector<2x128xf32> to vector<2x32xf32>
    %110 = vector.extract_strided_slice %107 {offsets = [0, 32], sizes = [2, 32], strides = [1, 1]} : vector<2x128xf32> to vector<2x32xf32>
    %111 = vector.extract_strided_slice %108 {offsets = [0, 64], sizes = [2, 32], strides = [1, 1]} : vector<2x128xf32> to vector<2x32xf32>
    %112 = vector.extract_strided_slice %107 {offsets = [0, 96], sizes = [2, 32], strides = [1, 1]} : vector<2x128xf32> to vector<2x32xf32>
    %113 = arith.mulf %110, %99 : vector<2x32xf32>
    %114 = arith.mulf %109, %111 : vector<2x32xf32>
    %115 = arith.addf %113, %114 : vector<2x32xf32>
    %116 = math.tanh %115 : vector<2x32xf32>
    %117 = arith.mulf %112, %116 : vector<2x32xf32>
    %c3_i32 = arith.constant 3 : i32
    %118 = vector.broadcast %c3_i32 : i32 to vector<2x1xi32>
    %119 = arith.cmpi sgt, %0, %118 : vector<2x1xi32>
    %120 = vector.shape_cast %119 : vector<2x1xi1> to vector<2x1xi1>
    %121 = vector.broadcast %120 : vector<2x1xi1> to vector<2x32xi1>
    %122 = arith.select %121, %117, %96 : vector<2x32xi1>, vector<2x32xf32>
    %123 = vector.shape_cast %119 : vector<2x1xi1> to vector<2x1xi1>
    %124 = vector.broadcast %123 : vector<2x1xi1> to vector<2x32xi1>
    %125 = arith.select %124, %115, %99 : vector<2x32xi1>, vector<2x32xf32>
    %126 = vector.extract_strided_slice %19 {offsets = [8, 0], sizes = [2, 128], strides = [1, 1]} : vector<16x128xf32> to vector<2x128xf32>
    %cst_32 = arith.constant dense<0.000000e+00> : vector<2x128xf32>
    %127 = tpu.matmul %122, %1, %cst_32 {dimension_numbers = #tpu.dot_dimension_numbers<[1], [0], [0], [1], [0, 0, 1, 1], [], []>} : vector<2x32xf32>, vector<32x128xf32>, vector<2x128xf32> -> vector<2x128xf32>
    %128 = arith.addf %126, %127 : vector<2x128xf32>
    %129 = arith.negf %128 : vector<2x128xf32>
    %130 = math.exp %129 : vector<2x128xf32>
    %cst_33 = arith.constant 1.000000e+00 : f32
    %131 = vector.broadcast %cst_33 : f32 to vector<2x128xf32>
    %132 = arith.addf %131, %130 : vector<2x128xf32>
    %133 = arith.divf %131, %132 : vector<2x128xf32>
    %134 = math.tanh %128 : vector<2x128xf32>
    %135 = vector.extract_strided_slice %133 {offsets = [0, 0], sizes = [2, 32], strides = [1, 1]} : vector<2x128xf32> to vector<2x32xf32>
    %136 = vector.extract_strided_slice %133 {offsets = [0, 32], sizes = [2, 32], strides = [1, 1]} : vector<2x128xf32> to vector<2x32xf32>
    %137 = vector.extract_strided_slice %134 {offsets = [0, 64], sizes = [2, 32], strides = [1, 1]} : vector<2x128xf32> to vector<2x32xf32>
    %138 = vector.extract_strided_slice %133 {offsets = [0, 96], sizes = [2, 32], strides = [1, 1]} : vector<2x128xf32> to vector<2x32xf32>
    %139 = arith.mulf %136, %125 : vector<2x32xf32>
    %140 = arith.mulf %135, %137 : vector<2x32xf32>
    %141 = arith.addf %139, %140 : vector<2x32xf32>
    %142 = math.tanh %141 : vector<2x32xf32>
    %143 = arith.mulf %138, %142 : vector<2x32xf32>
    %c4_i32 = arith.constant 4 : i32
    %144 = vector.broadcast %c4_i32 : i32 to vector<2x1xi32>
    %145 = arith.cmpi sgt, %0, %144 : vector<2x1xi32>
    %146 = vector.shape_cast %145 : vector<2x1xi1> to vector<2x1xi1>
    %147 = vector.broadcast %146 : vector<2x1xi1> to vector<2x32xi1>
    %148 = arith.select %147, %143, %122 : vector<2x32xi1>, vector<2x32xf32>
    %149 = vector.shape_cast %145 : vector<2x1xi1> to vector<2x1xi1>
    %150 = vector.broadcast %149 : vector<2x1xi1> to vector<2x32xi1>
    %151 = arith.select %150, %141, %125 : vector<2x32xi1>, vector<2x32xf32>
    %152 = vector.extract_strided_slice %19 {offsets = [10, 0], sizes = [2, 128], strides = [1, 1]} : vector<16x128xf32> to vector<2x128xf32>
    %cst_34 = arith.constant dense<0.000000e+00> : vector<2x128xf32>
    %153 = tpu.matmul %148, %1, %cst_34 {dimension_numbers = #tpu.dot_dimension_numbers<[1], [0], [0], [1], [0, 0, 1, 1], [], []>} : vector<2x32xf32>, vector<32x128xf32>, vector<2x128xf32> -> vector<2x128xf32>
    %154 = arith.addf %152, %153 : vector<2x128xf32>
    %155 = arith.negf %154 : vector<2x128xf32>
    %156 = math.exp %155 : vector<2x128xf32>
    %cst_35 = arith.constant 1.000000e+00 : f32
    %157 = vector.broadcast %cst_35 : f32 to vector<2x128xf32>
    %158 = arith.addf %157, %156 : vector<2x128xf32>
    %159 = arith.divf %157, %158 : vector<2x128xf32>
    %160 = math.tanh %154 : vector<2x128xf32>
    %161 = vector.extract_strided_slice %159 {offsets = [0, 0], sizes = [2, 32], strides = [1, 1]} : vector<2x128xf32> to vector<2x32xf32>
    %162 = vector.extract_strided_slice %159 {offsets = [0, 32], sizes = [2, 32], strides = [1, 1]} : vector<2x128xf32> to vector<2x32xf32>
    %163 = vector.extract_strided_slice %160 {offsets = [0, 64], sizes = [2, 32], strides = [1, 1]} : vector<2x128xf32> to vector<2x32xf32>
    %164 = vector.extract_strided_slice %159 {offsets = [0, 96], sizes = [2, 32], strides = [1, 1]} : vector<2x128xf32> to vector<2x32xf32>
    %165 = arith.mulf %162, %151 : vector<2x32xf32>
    %166 = arith.mulf %161, %163 : vector<2x32xf32>
    %167 = arith.addf %165, %166 : vector<2x32xf32>
    %168 = math.tanh %167 : vector<2x32xf32>
    %169 = arith.mulf %164, %168 : vector<2x32xf32>
    %c5_i32 = arith.constant 5 : i32
    %170 = vector.broadcast %c5_i32 : i32 to vector<2x1xi32>
    %171 = arith.cmpi sgt, %0, %170 : vector<2x1xi32>
    %172 = vector.shape_cast %171 : vector<2x1xi1> to vector<2x1xi1>
    %173 = vector.broadcast %172 : vector<2x1xi1> to vector<2x32xi1>
    %174 = arith.select %173, %169, %148 : vector<2x32xi1>, vector<2x32xf32>
    %175 = vector.shape_cast %171 : vector<2x1xi1> to vector<2x1xi1>
    %176 = vector.broadcast %175 : vector<2x1xi1> to vector<2x32xi1>
    %177 = arith.select %176, %167, %151 : vector<2x32xi1>, vector<2x32xf32>
    %178 = vector.extract_strided_slice %19 {offsets = [12, 0], sizes = [2, 128], strides = [1, 1]} : vector<16x128xf32> to vector<2x128xf32>
    %cst_36 = arith.constant dense<0.000000e+00> : vector<2x128xf32>
    %179 = tpu.matmul %174, %1, %cst_36 {dimension_numbers = #tpu.dot_dimension_numbers<[1], [0], [0], [1], [0, 0, 1, 1], [], []>} : vector<2x32xf32>, vector<32x128xf32>, vector<2x128xf32> -> vector<2x128xf32>
    %180 = arith.addf %178, %179 : vector<2x128xf32>
    %181 = arith.negf %180 : vector<2x128xf32>
    %182 = math.exp %181 : vector<2x128xf32>
    %cst_37 = arith.constant 1.000000e+00 : f32
    %183 = vector.broadcast %cst_37 : f32 to vector<2x128xf32>
    %184 = arith.addf %183, %182 : vector<2x128xf32>
    %185 = arith.divf %183, %184 : vector<2x128xf32>
    %186 = math.tanh %180 : vector<2x128xf32>
    %187 = vector.extract_strided_slice %185 {offsets = [0, 0], sizes = [2, 32], strides = [1, 1]} : vector<2x128xf32> to vector<2x32xf32>
    %188 = vector.extract_strided_slice %185 {offsets = [0, 32], sizes = [2, 32], strides = [1, 1]} : vector<2x128xf32> to vector<2x32xf32>
    %189 = vector.extract_strided_slice %186 {offsets = [0, 64], sizes = [2, 32], strides = [1, 1]} : vector<2x128xf32> to vector<2x32xf32>
    %190 = vector.extract_strided_slice %185 {offsets = [0, 96], sizes = [2, 32], strides = [1, 1]} : vector<2x128xf32> to vector<2x32xf32>
    %191 = arith.mulf %188, %177 : vector<2x32xf32>
    %192 = arith.mulf %187, %189 : vector<2x32xf32>
    %193 = arith.addf %191, %192 : vector<2x32xf32>
    %194 = math.tanh %193 : vector<2x32xf32>
    %195 = arith.mulf %190, %194 : vector<2x32xf32>
    %c6_i32 = arith.constant 6 : i32
    %196 = vector.broadcast %c6_i32 : i32 to vector<2x1xi32>
    %197 = arith.cmpi sgt, %0, %196 : vector<2x1xi32>
    %198 = vector.shape_cast %197 : vector<2x1xi1> to vector<2x1xi1>
    %199 = vector.broadcast %198 : vector<2x1xi1> to vector<2x32xi1>
    %200 = arith.select %199, %195, %174 : vector<2x32xi1>, vector<2x32xf32>
    %201 = vector.shape_cast %197 : vector<2x1xi1> to vector<2x1xi1>
    %202 = vector.broadcast %201 : vector<2x1xi1> to vector<2x32xi1>
    %203 = arith.select %202, %193, %177 : vector<2x32xi1>, vector<2x32xf32>
    %204 = vector.extract_strided_slice %19 {offsets = [14, 0], sizes = [2, 128], strides = [1, 1]} : vector<16x128xf32> to vector<2x128xf32>
    %cst_38 = arith.constant dense<0.000000e+00> : vector<2x128xf32>
    %205 = tpu.matmul %200, %1, %cst_38 {dimension_numbers = #tpu.dot_dimension_numbers<[1], [0], [0], [1], [0, 0, 1, 1], [], []>} : vector<2x32xf32>, vector<32x128xf32>, vector<2x128xf32> -> vector<2x128xf32>
    %206 = arith.addf %204, %205 : vector<2x128xf32>
    %207 = arith.negf %206 : vector<2x128xf32>
    %208 = math.exp %207 : vector<2x128xf32>
    %cst_39 = arith.constant 1.000000e+00 : f32
    %209 = vector.broadcast %cst_39 : f32 to vector<2x128xf32>
    %210 = arith.addf %209, %208 : vector<2x128xf32>
    %211 = arith.divf %209, %210 : vector<2x128xf32>
    %212 = math.tanh %206 : vector<2x128xf32>
    %213 = vector.extract_strided_slice %211 {offsets = [0, 0], sizes = [2, 32], strides = [1, 1]} : vector<2x128xf32> to vector<2x32xf32>
    %214 = vector.extract_strided_slice %211 {offsets = [0, 32], sizes = [2, 32], strides = [1, 1]} : vector<2x128xf32> to vector<2x32xf32>
    %215 = vector.extract_strided_slice %212 {offsets = [0, 64], sizes = [2, 32], strides = [1, 1]} : vector<2x128xf32> to vector<2x32xf32>
    %216 = vector.extract_strided_slice %211 {offsets = [0, 96], sizes = [2, 32], strides = [1, 1]} : vector<2x128xf32> to vector<2x32xf32>
    %217 = arith.mulf %214, %203 : vector<2x32xf32>
    %218 = arith.mulf %213, %215 : vector<2x32xf32>
    %219 = arith.addf %217, %218 : vector<2x32xf32>
    %220 = math.tanh %219 : vector<2x32xf32>
    %221 = arith.mulf %216, %220 : vector<2x32xf32>
    %c7_i32 = arith.constant 7 : i32
    %222 = vector.broadcast %c7_i32 : i32 to vector<2x1xi32>
    %223 = arith.cmpi sgt, %0, %222 : vector<2x1xi32>
    %224 = vector.shape_cast %223 : vector<2x1xi1> to vector<2x1xi1>
    %225 = vector.broadcast %224 : vector<2x1xi1> to vector<2x32xi1>
    %226 = arith.select %225, %221, %200 : vector<2x32xi1>, vector<2x32xf32>
    %227 = vector.shape_cast %223 : vector<2x1xi1> to vector<2x1xi1>
    %228 = vector.broadcast %227 : vector<2x1xi1> to vector<2x32xi1>
    %229 = arith.select %228, %219, %203 : vector<2x32xi1>, vector<2x32xf32>
    %c0_40 = arith.constant 0 : index
    %c0_41 = arith.constant 0 : index
    %230 = vector.load %arg11[%c0_40, %c0_41] : memref<32x64xf32, #tpu.memory_space<vmem>>, vector<32x64xf32>
    %cst_42 = arith.constant dense<0.000000e+00> : vector<2x64xf32>
    %231 = tpu.matmul %226, %230, %cst_42 {dimension_numbers = #tpu.dot_dimension_numbers<[1], [0], [0], [1], [0, 0, 1, 1], [], []>} : vector<2x32xf32>, vector<32x64xf32>, vector<2x64xf32> -> vector<2x64xf32>
    %c0_43 = arith.constant 0 : index
    %c0_44 = arith.constant 0 : index
    %232 = vector.load %arg12[%c0_43, %c0_44] : memref<1x64xf32, #tpu.memory_space<vmem>>, vector<1x64xf32>
    %233 = vector.broadcast %232 : vector<1x64xf32> to vector<2x64xf32>
    %234 = arith.addf %231, %233 : vector<2x64xf32>
    %cst_45 = arith.constant 0.000000e+00 : f32
    %235 = vector.broadcast %cst_45 : f32 to vector<2x64xf32>
    %236 = arith.maximumf %234, %235 : vector<2x64xf32>
    %c0_46 = arith.constant 0 : index
    %c0_47 = arith.constant 0 : index
    %237 = vector.load %arg13[%c0_46, %c0_47] : memref<64x64xf32, #tpu.memory_space<vmem>>, vector<64x64xf32>
    %cst_48 = arith.constant dense<0.000000e+00> : vector<2x64xf32>
    %238 = tpu.matmul %236, %237, %cst_48 {dimension_numbers = #tpu.dot_dimension_numbers<[1], [0], [0], [1], [0, 0, 1, 1], [], []>} : vector<2x64xf32>, vector<64x64xf32>, vector<2x64xf32> -> vector<2x64xf32>
    %c0_49 = arith.constant 0 : index
    %c0_50 = arith.constant 0 : index
    %239 = vector.load %arg14[%c0_49, %c0_50] : memref<1x64xf32, #tpu.memory_space<vmem>>, vector<1x64xf32>
    %240 = vector.broadcast %239 : vector<1x64xf32> to vector<2x64xf32>
    %241 = arith.addf %238, %240 : vector<2x64xf32>
    %242 = tpu.concatenate %241, %226, %229 in 1 : vector<2x64xf32>, vector<2x32xf32>, vector<2x32xf32> -> vector<2x128xf32>
    %c0_51 = arith.constant 0 : index
    %c0_52 = arith.constant 0 : index
    %243 = vector.load %arg15[%c0_51, %c0_52] : memref<2x128xf32, #tpu.memory_space<vmem>>, vector<2x128xf32>
    tpu.vector_store %arg15[%c0_51, %c0_52], %242 {strides = array<i32>} : memref<2x128xf32, #tpu.memory_space<vmem>>, vector<2x128xf32>,
    return
  }
}

</mosaic_0001>

<llo_original>
// kernel: policy_value_lstm_forward.1
$region0: #{policy_value_lstm_forward.1}
  #allocation0 [shape = 'u32[]', space=smem, size = 0x4, offset = 0x4, fixed_abs, tag = 'smem constant byte address 0x4 - core index']
  #allocation1 [shape = 'u32[72,128]{1,0:T(1,128)}', space=vmem, size = 0x9000, scoped, tag = 'internal scratch']
  %s0 = inlined_call_operand.vmem [shape: f32[16,16], index: 0, kind: input, shape index: {}]
  %s1 = inlined_call_operand.vmem [shape: s32[2,1], index: 1, kind: input, shape index: {}]
  %s2 = inlined_call_operand.vmem [shape: f32[2,32], index: 2, kind: input, shape index: {}]
  %s3 = inlined_call_operand.vmem [shape: f32[2,32], index: 3, kind: input, shape index: {}]
  %s4 = inlined_call_operand.vmem [shape: f32[16,64], index: 4, kind: input, shape index: {}]
  %s5 = inlined_call_operand.vmem [shape: f32[1,64], index: 5, kind: input, shape index: {}]
  %s6 = inlined_call_operand.vmem [shape: f32[64,64], index: 6, kind: input, shape index: {}]
  %s7 = inlined_call_operand.vmem [shape: f32[1,64], index: 7, kind: input, shape index: {}]
  %s8 = inlined_call_operand.vmem [shape: f32[64,128], index: 8, kind: input, shape index: {}]
  %s9 = inlined_call_operand.vmem [shape: f32[32,128], index: 9, kind: input, shape index: {}]
  %s10 = inlined_call_operand.vmem [shape: f32[1,128], index: 10, kind: input, shape index: {}]
  %s11 = inlined_call_operand.vmem [shape: f32[32,64], index: 11, kind: input, shape index: {}]
  %s12 = inlined_call_operand.vmem [shape: f32[1,64], index: 12, kind: input, shape index: {}]
  %s13 = inlined_call_operand.vmem [shape: f32[64,64], index: 13, kind: input, shape index: {}]
  %s14 = inlined_call_operand.vmem [shape: f32[1,64], index: 14, kind: input, shape index: {}]
  %s15 = inlined_call_operand.vmem [shape: f32[2,128], index: 15, kind: output, shape index: {}]
  %s16 = sld [smem:[#allocation0]]
  $region70: #{policy_value_lstm_forward.1} parent=0
    _
  %s18 = ssub.s32 1, %s16
  %s19 = scalar_select 0, %s18, %s16
  // Predicated region
  $region2: #{policy_value_lstm_forward.1} parent=0 // pred_check
    _
  $region3: #{policy_value_lstm_forward.1} parent=0 // pred_check_branch
    %21 = sbr.rel (0) target = $region5
  $region4: #{policy_value_lstm_forward.1} parent=0 // pred_region
    _
  $region5: #{policy_value_lstm_forward.1} parent=0 // pred_fallthru
    _
  // Predicated region
  $region6: #{policy_value_lstm_forward.1} parent=0 // pred_check
    _
  $region7: #{policy_value_lstm_forward.1} parent=0 // pred_check_branch
    %23 = sbr.rel (0) target = $region9
  $region8: #{policy_value_lstm_forward.1} parent=0 // pred_region
    _
  $region9: #{policy_value_lstm_forward.1} parent=0 // pred_fallthru
    _
  // Predicated region
  $region10: #{policy_value_lstm_forward.1} parent=0 // pred_check
    _
  $region11: #{policy_value_lstm_forward.1} parent=0 // pred_check_branch
    %25 = sbr.rel (0) target = $region13
  $region12: #{policy_value_lstm_forward.1} parent=0 // pred_region
    _
  $region13: #{policy_value_lstm_forward.1} parent=0 // pred_fallthru
    _
  // Predicated region
  $region14: #{policy_value_lstm_forward.1} parent=0 // pred_check
    _
  $region15: #{policy_value_lstm_forward.1} parent=0 // pred_check_branch
    %27 = sbr.rel (0) target = $region17
  $region16: #{policy_value_lstm_forward.1} parent=0 // pred_region
    _
  $region17: #{policy_value_lstm_forward.1} parent=0 // pred_fallthru
    _
  // Predicated region
  $region18: #{policy_value_lstm_forward.1} parent=0 // pred_check
    _
  $region19: #{policy_value_lstm_forward.1} parent=0 // pred_check_branch
    %29 = sbr.rel (0) target = $region21
  $region20: #{policy_value_lstm_forward.1} parent=0 // pred_region
    _
  $region21: #{policy_value_lstm_forward.1} parent=0 // pred_fallthru
    _
  // Predicated region
  $region22: #{policy_value_lstm_forward.1} parent=0 // pred_check
    _
  $region23: #{policy_value_lstm_forward.1} parent=0 // pred_check_branch
    %31 = sbr.rel (0) target = $region25
  $region24: #{policy_value_lstm_forward.1} parent=0 // pred_region
    _
  $region25: #{policy_value_lstm_forward.1} parent=0 // pred_fallthru
    _
  // Predicated region
  $region26: #{policy_value_lstm_forward.1} parent=0 // pred_check
    _
  $region27: #{policy_value_lstm_forward.1} parent=0 // pred_check_branch
    %33 = sbr.rel (0) target = $region29
  $region28: #{policy_value_lstm_forward.1} parent=0 // pred_region
    _
  $region29: #{policy_value_lstm_forward.1} parent=0 // pred_fallthru
    _
  // Predicated region
  $region30: #{policy_value_lstm_forward.1} parent=0 // pred_check
    _
  $region31: #{policy_value_lstm_forward.1} parent=0 // pred_check_branch
    %35 = sbr.rel (0) target = $region33
  $region32: #{policy_value_lstm_forward.1} parent=0 // pred_region
    _
  $region33: #{policy_value_lstm_forward.1} parent=0 // pred_fallthru
    _
  // Predicated region
  $region34: #{policy_value_lstm_forward.1} parent=0 // pred_check
    _
  $region35: #{policy_value_lstm_forward.1} parent=0 // pred_check_branch
    %37 = sbr.rel (0) target = $region37
  $region36: #{policy_value_lstm_forward.1} parent=0 // pred_region
    _
  $region37: #{policy_value_lstm_forward.1} parent=0 // pred_fallthru
    _
  // Predicated region
  $region38: #{policy_value_lstm_forward.1} parent=0 // pred_check
    _
  $region39: #{policy_value_lstm_forward.1} parent=0 // pred_check_branch
    %39 = sbr.rel (0) target = $region41
  $region40: #{policy_value_lstm_forward.1} parent=0 // pred_region
    _
  $region41: #{policy_value_lstm_forward.1} parent=0 // pred_fallthru
    _
  // Predicated region
  $region42: #{policy_value_lstm_forward.1} parent=0 // pred_check
    _
  $region43: #{policy_value_lstm_forward.1} parent=0 // pred_check_branch
    %41 = sbr.rel (0) target = $region45
  $region44: #{policy_value_lstm_forward.1} parent=0 // pred_region
    _
  $region45: #{policy_value_lstm_forward.1} parent=0 // pred_fallthru
    _
  // Predicated region
  $region46: #{policy_value_lstm_forward.1} parent=0 // pred_check
    _
  $region47: #{policy_value_lstm_forward.1} parent=0 // pred_check_branch
    %43 = sbr.rel (0) target = $region49
  $region48: #{policy_value_lstm_forward.1} parent=0 // pred_region
    _
  $region49: #{policy_value_lstm_forward.1} parent=0 // pred_fallthru
    _
  // Predicated region
  $region50: #{policy_value_lstm_forward.1} parent=0 // pred_check
    _
  $region51: #{policy_value_lstm_forward.1} parent=0 // pred_check_branch
    %45 = sbr.rel (0) target = $region53
  $region52: #{policy_value_lstm_forward.1} parent=0 // pred_region
    _
  $region53: #{policy_value_lstm_forward.1} parent=0 // pred_fallthru
    _
  // Predicated region
  $region54: #{policy_value_lstm_forward.1} parent=0 // pred_check
    _
  $region55: #{policy_value_lstm_forward.1} parent=0 // pred_check_branch
    %47 = sbr.rel (0) target = $region57
  $region56: #{policy_value_lstm_forward.1} parent=0 // pred_region
    _
  $region57: #{policy_value_lstm_forward.1} parent=0 // pred_fallthru
    _
  // Predicated region
  $region58: #{policy_value_lstm_forward.1} parent=0 // pred_check
    _
  $region59: #{policy_value_lstm_forward.1} parent=0 // pred_check_branch
    %49 = sbr.rel (0) target = $region61
  $region60: #{policy_value_lstm_forward.1} parent=0 // pred_region
    _
  $region61: #{policy_value_lstm_forward.1} parent=0 // pred_fallthru
    _
  %v50 = vld [vmem:[%s1] sm:$0x3]
  %v51 = vld [vmem:[%s9] sm:$0xff]
  %v52 = vld [vmem:[%s9 + $0x8] sm:$0xff]
  %v53 = vld [vmem:[%s9 + $0x10] sm:$0xff]
  %v54 = vld [vmem:[%s9 + $0x18] sm:$0xff]
  %v55 = vld [vmem:[%s0] sm:$0xff]
  %v56 = vld [vmem:[%s0 + $0x8] sm:$0xff]
  %v57 = vld [vmem:[%s4] sm:$0xff]
  %v58 = vld [vmem:[%s4 + $0x8] sm:$0xff]
  %v59 = vld [vmem:[%s5] sm:$0x1]
  %v61 = vperm.slane %v59, 0
  %vm63 = vcmask 130048
  %v65 = vsel %vm63, %v55, 0
  %v68 = vsel %vm63, %v56, 0
  %70 = vmatpush.msra.mxu0 0.0
  %71 = vmatpush.msra.mxu0 0.0
  %72 = vmatpush.msra.mxu0 0.0
  %73 = vmatpush.msra.mxu0 0.0
  %74 = vmatpush.msra.mxu0 0.0
  %75 = vmatpush.msra.mxu0 0.0
  %76 = vmatpush.msra.mxu0 0.0
  %77 = vmatpush.msra.mxu0 0.0
  %78 = vmatpush.msra.mxu0 0.0
  %79 = vmatpush.msra.mxu0 0.0
  %80 = vmatpush.msra.mxu0 0.0
  %81 = vmatpush.msra.mxu0 0.0
  %82 = vmatpush.msra.mxu0 0.0
  %83 = vmatpush.msra.mxu0 0.0
  %84 = vmatpush.msra.mxu0 %v58
  %85 = vmatpush.msra.mxu0 %v57
  %86 = vmatmul.f32.gmra.mxu0 %v65
  %v87 = vpop.f32.mrf.mxu0
  %v88 = vadd.f32 %v61, %v87
  %89 = vmatmul.f32.gmra.mxu0 %v68
  %v90 = vpop.f32.mrf.mxu0
  %v91 = vadd.f32 %v61, %v90
  %92 = vdwg.mxu0
  %v93 = vmax.f32 %v88, 0.0
  %v94 = vmax.f32 %v91, 0.0
  %v95 = vld [vmem:[%s6] sm:$0xff]
  %v96 = vld [vmem:[%s6 + $0x8] sm:$0xff]
  %v97 = vld [vmem:[%s6 + $0x10] sm:$0xff]
  %v98 = vld [vmem:[%s6 + $0x18] sm:$0xff]
  %v99 = vld [vmem:[%s6 + $0x20] sm:$0xff]
  %v100 = vld [vmem:[%s6 + $0x28] sm:$0xff]
  %v101 = vld [vmem:[%s6 + $0x30] sm:$0xff]
  %v102 = vld [vmem:[%s6 + $0x38] sm:$0xff]
  %v103 = vld [vmem:[%s7] sm:$0x1]
  %v105 = vperm.slane %v103, 0
  %vm107 = vcmask 523264
  %v109 = vsel %vm107, %v93, 0
  %v112 = vsel %vm107, %v94, 0
  %114 = vmatpush.msra.mxu0 0.0
  %115 = vmatpush.msra.mxu0 0.0
  %116 = vmatpush.msra.mxu0 0.0
  %117 = vmatpush.msra.mxu0 0.0
  %118 = vmatpush.msra.mxu0 0.0
  %119 = vmatpush.msra.mxu0 0.0
  %120 = vmatpush.msra.mxu0 0.0
  %121 = vmatpush.msra.mxu0 0.0
  %122 = vmatpush.msra.mxu0 %v102
  %123 = vmatpush.msra.mxu0 %v101
  %124 = vmatpush.msra.mxu0 %v100
  %125 = vmatpush.msra.mxu0 %v99
  %126 = vmatpush.msra.mxu0 %v98
  %127 = vmatpush.msra.mxu0 %v97
  %128 = vmatpush.msra.mxu0 %v96
  %129 = vmatpush.msra.mxu0 %v95
  %130 = vmatmul.f32.gmra.mxu0 %v109
  %v131 = vpop.f32.mrf.mxu0
  %v132 = vadd.f32 %v105, %v131
  %133 = vmatmul.f32.gmra.mxu0 %v112
  %v134 = vpop.f32.mrf.mxu0
  %v135 = vadd.f32 %v105, %v134
  %136 = vdwg.mxu0
  %v137 = vld [vmem:[%s8] sm:$0xff]
  %v138 = vld [vmem:[%s8 + $0x8] sm:$0xff]
  %v139 = vld [vmem:[%s8 + $0x10] sm:$0xff]
  %v140 = vld [vmem:[%s8 + $0x18] sm:$0xff]
  %v141 = vld [vmem:[%s8 + $0x20] sm:$0xff]
  %v142 = vld [vmem:[%s8 + $0x28] sm:$0xff]
  %v143 = vld [vmem:[%s8 + $0x30] sm:$0xff]
  %v144 = vld [vmem:[%s8 + $0x38] sm:$0xff]
  %v145 = vld [vmem:[%s10] sm:$0x1]
  %v147 = vperm.slane %v145, 0
  %v150 = vsel %vm107, %v132, 0
  %v153 = vsel %vm107, %v135, 0
  %155 = vmatpush.msra.mxu0 0.0
  %156 = vmatpush.msra.mxu0 0.0
  %157 = vmatpush.msra.mxu0 0.0
  %158 = vmatpush.msra.mxu0 0.0
  %159 = vmatpush.msra.mxu0 0.0
  %160 = vmatpush.msra.mxu0 0.0
  %161 = vmatpush.msra.mxu0 0.0
  %162 = vmatpush.msra.mxu0 0.0
  %163 = vmatpush.msra.mxu0 %v144
  %164 = vmatpush.msra.mxu0 %v143
  %165 = vmatpush.msra.mxu0 %v142
  %166 = vmatpush.msra.mxu0 %v141
  %167 = vmatpush.msra.mxu0 %v140
  %168 = vmatpush.msra.mxu0 %v139
  %169 = vmatpush.msra.mxu0 %v138
  %170 = vmatpush.msra.mxu0 %v137
  %171 = vmatmul.f32.gmra.mxu0 %v150
  %v172 = vpop.f32.mrf.mxu0
  %v173 = vadd.f32 %v147, %v172
  %174 = vmatmul.f32.gmra.mxu0 %v153
  %v175 = vpop.f32.mrf.mxu0
  %v176 = vadd.f32 %v147, %v175
  %177 = vdwg.mxu0
  %v178 = vld [vmem:[%s2] sm:$0x3]
  %v179 = vld [vmem:[%s3] sm:$0x3]
  %vm180 = vcmask 261120
  %v182 = vsel %vm180, %v178, 0
  %184 = vmatpush.msra.mxu0 0.0
  %185 = vmatpush.msra.mxu0 0.0
  %186 = vmatpush.msra.mxu0 0.0
  %187 = vmatpush.msra.mxu0 0.0
  %188 = vmatpush.msra.mxu0 0.0
  %189 = vmatpush.msra.mxu0 0.0
  %190 = vmatpush.msra.mxu0 0.0
  %191 = vmatpush.msra.mxu0 0.0
  %192 = vmatpush.msra.mxu0 0.0
  %193 = vmatpush.msra.mxu0 0.0
  %194 = vmatpush.msra.mxu0 0.0
  %195 = vmatpush.msra.mxu0 0.0
  %196 = vmatpush.msra.mxu0 %v54
  %197 = vmatpush.msra.mxu0 %v53
  %198 = vmatpush.msra.mxu0 %v52
  %199 = vmatpush.msra.mxu0 %v51
  %200 = vmatmul.f32.gmra.mxu0 %v182
  %v201 = vpop.f32.mrf.mxu0
  %v202 = vadd.f32 0.0, %v201
  %203 = vdwg.mxu0
  %v204 = vadd.f32 %v173, %v202
  %v205 = vxor.u32 %v204, 2147483648
  %v206 = vmul.f32 %v205, 1.442695
  %v207 = vpow.pop %v206
  %v208 = vadd.f32 %v207, 1.0
  %v209 = vrcp.pop %v208
  %v210 = vmul.f32 %v208, %v209
  %v211 = vsub.f32 1.0, %v210
  %v212 = vmul.f32 %v209, %v211
  %v213 = vadd.f32 %v209, %v212
  %vm214 = vweird.f32 %v208
  %vm215 = vweird.f32 %v209
  %vm216 = vmor %vm214, %vm215
  %v217 = vsel %vm216, %v209, %v213
  %v218 = vand.u32 2147483647, %v208
  %vm219 = vcmp.eq.f32.partialorder %v218, 8.507059e+37
  %v220 = vand.u32 %v208, 2147483648
  %v221 = vor.u32 1.1754944e-38, %v220
  %v222 = vsel %vm219, %v221, %v217
  %v223 = vmul.f32 1.0, %v222
  %v224 = vtanh.pop %v204
  %226 = vrot.lane.b32.xlu0 %v179, 32
  %v227 = vpop.permute.xlu0 %226
  %v229 = vmul.f32 %v223, %v227
  %231 = vrot.lane.b32.xlu0 %v224, 64
  %v232 = vpop.permute.xlu0 %231
  %v234 = vmul.f32 %v223, %v232
  %236 = vrot.lane.b32.xlu0 %v234, 32
  %v237 = vpop.permute.xlu0 %236
  %v239 = vadd.f32 %v229, %v237
  %v240 = vtanh.pop %v239
  %242 = vrot.lane.b32.xlu0 %v240, 64
  %v243 = vpop.permute.xlu0 %242
  %v245 = vmul.f32 %v223, %v243
  %vm246 = vcmp.gt.s32.totalorder %v50, 0
  %v247 = vsel %vm246, 1, 0
  %248 = vset.pattern.permute.xlu0 0
  %249 = vperm.xlu0 %248, %v247
  %v250 = vpop.permute.xlu0 %249
  %vm251 = vcmp.eq.s32.totalorder %v250, 1
  %252 = vrot.lane.b32.xlu0 %v178, 96
  %v253 = vpop.permute.xlu0 %252
  %v255 = vsel %vm251, %v245, %v253
  %v256 = vsel %vm251, %v239, %v227
  %258 = vrot.lane.b32.xlu0 %v255, 32
  %v259 = vpop.permute.xlu0 %258
  %v260 = vsel %vm180, %v259, 0
  %262 = vmatpush.msra.mxu0 0.0
  %263 = vmatpush.msra.mxu0 0.0
  %264 = vmatpush.msra.mxu0 0.0
  %265 = vmatpush.msra.mxu0 0.0
  %266 = vmatpush.msra.mxu0 0.0
  %267 = vmatpush.msra.mxu0 0.0
  %268 = vmatpush.msra.mxu0 0.0
  %269 = vmatpush.msra.mxu0 0.0
  %270 = vmatpush.msra.mxu0 0.0
  %271 = vmatpush.msra.mxu0 0.0
  %272 = vmatpush.msra.mxu0 0.0
  %273 = vmatpush.msra.mxu0 0.0
  %274 = vmatpush.msra.mxu0 %v54
  %275 = vmatpush.msra.mxu0 %v53
  %276 = vmatpush.msra.mxu0 %v52
  %277 = vmatpush.msra.mxu0 %v51
  %278 = vmatmul.f32.gmra.mxu0 %v260
  %v279 = vpop.f32.mrf.mxu0
  %v280 = vadd.f32 0.0, %v279
  %281 = vdwg.mxu0
  %v283 = vrot.slane %v280, 6
  %v285 = vadd.f32 %v173, %v283
  %v286 = vxor.u32 %v285, 2147483648
  %v287 = vmul.f32 %v286, 1.442695
  %v288 = vpow.pop %v287
  %v289 = vadd.f32 %v288, 1.0
  %v290 = vrcp.pop %v289
  %v291 = vmul.f32 %v289, %v290
  %v292 = vsub.f32 1.0, %v291
  %v293 = vmul.f32 %v290, %v292
  %v294 = vadd.f32 %v290, %v293
  %vm295 = vweird.f32 %v289
  %vm296 = vweird.f32 %v290
  %vm297 = vmor %vm295, %vm296
  %v298 = vsel %vm297, %v290, %v294
  %v299 = vand.u32 2147483647, %v289
  %vm300 = vcmp.eq.f32.partialorder %v299, 8.507059e+37
  %v301 = vand.u32 %v289, 2147483648
  %v302 = vor.u32 1.1754944e-38, %v301
  %v303 = vsel %vm300, %v302, %v298
  %v304 = vmul.f32 1.0, %v303
  %v305 = vtanh.pop %v285
  %v307 = vrot.slane %v256, 6
  %v309 = vmul.f32 %v304, %v307
  %311 = vrot.lane.b32.xlu0 %v305, 64
  %v312 = vpop.permute.xlu0 %311
  %v314 = vmul.f32 %v304, %v312
  %316 = vrot.lane.b32.xlu0 %v314, 32
  %v317 = vpop.permute.xlu0 %316
  %v319 = vadd.f32 %v309, %v317
  %v320 = vtanh.pop %v319
  %322 = vrot.lane.b32.xlu0 %v320, 64
  %v323 = vpop.permute.xlu0 %322
  %v325 = vmul.f32 %v304, %v323
  %vm326 = vcmp.gt.s32.totalorder %v50, 1
  %v327 = vsel %vm326, 1, 0
  %328 = vset.pattern.permute.xlu0 0
  %329 = vperm.xlu0 %328, %v327
  %v330 = vpop.permute.xlu0 %329
  %vm331 = vcmp.eq.s32.totalorder %v330, 1
  %v333 = vrot.slane %v325, 2
  %334 = vrot.lane.b32.xlu0 %v333, 32
  %v335 = vpop.permute.xlu0 %334
  %v338 = vsel %vm331, %v335, %v259
  %v340 = vrot.slane %v319, 2
  %341 = vrot.lane.b32.xlu0 %v340, 96
  %v342 = vpop.permute.xlu0 %341
  %344 = vrot.lane.b32.xlu0 %v256, 96
  %v345 = vpop.permute.xlu0 %344
  %v347 = vsel %vm331, %v342, %v345
  %v349 = vsel %vm180, %v338, 0
  %351 = vmatpush.msra.mxu0 0.0
  %352 = vmatpush.msra.mxu0 0.0
  %353 = vmatpush.msra.mxu0 0.0
  %354 = vmatpush.msra.mxu0 0.0
  %355 = vmatpush.msra.mxu0 0.0
  %356 = vmatpush.msra.mxu0 0.0
  %357 = vmatpush.msra.mxu0 0.0
  %358 = vmatpush.msra.mxu0 0.0
  %359 = vmatpush.msra.mxu0 0.0
  %360 = vmatpush.msra.mxu0 0.0
  %361 = vmatpush.msra.mxu0 0.0
  %362 = vmatpush.msra.mxu0 0.0
  %363 = vmatpush.msra.mxu0 %v54
  %364 = vmatpush.msra.mxu0 %v53
  %365 = vmatpush.msra.mxu0 %v52
  %366 = vmatpush.msra.mxu0 %v51
  %367 = vmatmul.f32.gmra.mxu0 %v349
  %v368 = vpop.f32.mrf.mxu0
  %v369 = vadd.f32 0.0, %v368
  %370 = vdwg.mxu0
  %v372 = vrot.slane %v369, 4
  %v374 = vadd.f32 %v173, %v372
  %v375 = vxor.u32 %v374, 2147483648
  %v376 = vmul.f32 %v375, 1.442695
  %v377 = vpow.pop %v376
  %v378 = vadd.f32 %v377, 1.0
  %v379 = vrcp.pop %v378
  %v380 = vmul.f32 %v378, %v379
  %v381 = vsub.f32 1.0, %v380
  %v382 = vmul.f32 %v379, %v381
  %v383 = vadd.f32 %v379, %v382
  %vm384 = vweird.f32 %v378
  %vm385 = vweird.f32 %v379
  %vm386 = vmor %vm384, %vm385
  %v387 = vsel %vm386, %v379, %v383
  %v388 = vand.u32 2147483647, %v378
  %vm389 = vcmp.eq.f32.partialorder %v388, 8.507059e+37
  %v390 = vand.u32 %v378, 2147483648
  %v391 = vor.u32 1.1754944e-38, %v390
  %v392 = vsel %vm389, %v391, %v387
  %v393 = vmul.f32 1.0, %v392
  %v394 = vtanh.pop %v374
  %v396 = vrot.slane %v347, 4
  %397 = vrot.lane.b32.xlu0 %v396, 32
  %v398 = vpop.permute.xlu0 %397
  %v400 = vmul.f32 %v393, %v398
  %402 = vrot.lane.b32.xlu0 %v394, 64
  %v403 = vpop.permute.xlu0 %402
  %v405 = vmul.f32 %v393, %v403
  %407 = vrot.lane.b32.xlu0 %v405, 32
  %v408 = vpop.permute.xlu0 %407
  %v410 = vadd.f32 %v400, %v408
  %v411 = vtanh.pop %v410
  %413 = vrot.lane.b32.xlu0 %v411, 64
  %v414 = vpop.permute.xlu0 %413
  %v416 = vmul.f32 %v393, %v414
  %vm417 = vcmp.gt.s32.totalorder %v50, 2
  %v418 = vsel %vm417, 1, 0
  %419 = vset.pattern.permute.xlu0 0
  %420 = vperm.xlu0 %419, %v418
  %v421 = vpop.permute.xlu0 %420
  %vm422 = vcmp.eq.s32.totalorder %v421, 1
  %v424 = vrot.slane %v416, 4
  %425 = vrot.lane.b32.xlu0 %v424, 32
  %v426 = vpop.permute.xlu0 %425
  %v428 = vsel %vm422, %v426, %v338
  %v430 = vrot.slane %v410, 4
  %431 = vrot.lane.b32.xlu0 %v430, 96
  %v432 = vpop.permute.xlu0 %431
  %v434 = vsel %vm422, %v432, %v347
  %v436 = vsel %vm180, %v428, 0
  %438 = vmatpush.msra.mxu0 0.0
  %439 = vmatpush.msra.mxu0 0.0
  %440 = vmatpush.msra.mxu0 0.0
  %441 = vmatpush.msra.mxu0 0.0
  %442 = vmatpush.msra.mxu0 0.0
  %443 = vmatpush.msra.mxu0 0.0
  %444 = vmatpush.msra.mxu0 0.0
  %445 = vmatpush.msra.mxu0 0.0
  %446 = vmatpush.msra.mxu0 0.0
  %447 = vmatpush.msra.mxu0 0.0
  %448 = vmatpush.msra.mxu0 0.0
  %449 = vmatpush.msra.mxu0 0.0
  %450 = vmatpush.msra.mxu0 %v54
  %451 = vmatpush.msra.mxu0 %v53
  %452 = vmatpush.msra.mxu0 %v52
  %453 = vmatpush.msra.mxu0 %v51
  %454 = vmatmul.f32.gmra.mxu0 %v436
  %v455 = vpop.f32.mrf.mxu0
  %v456 = vadd.f32 0.0, %v455
  %457 = vdwg.mxu0
  %v459 = vrot.slane %v456, 2
  %v461 = vadd.f32 %v173, %v459
  %v462 = vxor.u32 %v461, 2147483648
  %v463 = vmul.f32 %v462, 1.442695
  %v464 = vpow.pop %v463
  %v465 = vadd.f32 %v464, 1.0
  %v466 = vrcp.pop %v465
  %v467 = vmul.f32 %v465, %v466
  %v468 = vsub.f32 1.0, %v467
  %v469 = vmul.f32 %v466, %v468
  %v470 = vadd.f32 %v466, %v469
  %vm471 = vweird.f32 %v465
  %vm472 = vweird.f32 %v466
  %vm473 = vmor %vm471, %vm472
  %v474 = vsel %vm473, %v466, %v470
  %v475 = vand.u32 2147483647, %v465
  %vm476 = vcmp.eq.f32.partialorder %v475, 8.507059e+37
  %v477 = vand.u32 %v465, 2147483648
  %v478 = vor.u32 1.1754944e-38, %v477
  %v479 = vsel %vm476, %v478, %v474
  %v480 = vmul.f32 1.0, %v479
  %v481 = vtanh.pop %v461
  %v483 = vrot.slane %v434, 2
  %484 = vrot.lane.b32.xlu0 %v483, 32
  %v485 = vpop.permute.xlu0 %484
  %v487 = vmul.f32 %v480, %v485
  %489 = vrot.lane.b32.xlu0 %v481, 64
  %v490 = vpop.permute.xlu0 %489
  %v492 = vmul.f32 %v480, %v490
  %494 = vrot.lane.b32.xlu0 %v492, 32
  %v495 = vpop.permute.xlu0 %494
  %v497 = vadd.f32 %v487, %v495
  %v498 = vtanh.pop %v497
  %500 = vrot.lane.b32.xlu0 %v498, 64
  %v501 = vpop.permute.xlu0 %500
  %v503 = vmul.f32 %v480, %v501
  %vm504 = vcmp.gt.s32.totalorder %v50, 3
  %v505 = vsel %vm504, 1, 0
  %506 = vset.pattern.permute.xlu0 0
  %507 = vperm.xlu0 %506, %v505
  %v508 = vpop.permute.xlu0 %507
  %vm509 = vcmp.eq.s32.totalorder %v508, 1
  %v511 = vrot.slane %v503, 6
  %512 = vrot.lane.b32.xlu0 %v511, 32
  %v513 = vpop.permute.xlu0 %512
  %v515 = vsel %vm509, %v513, %v428
  %v517 = vrot.slane %v497, 6
  %518 = vrot.lane.b32.xlu0 %v517, 96
  %v519 = vpop.permute.xlu0 %518
  %v521 = vsel %vm509, %v519, %v434
  %v523 = vsel %vm180, %v515, 0
  %525 = vmatpush.msra.mxu0 0.0
  %526 = vmatpush.msra.mxu0 0.0
  %527 = vmatpush.msra.mxu0 0.0
  %528 = vmatpush.msra.mxu0 0.0
  %529 = vmatpush.msra.mxu0 0.0
  %530 = vmatpush.msra.mxu0 0.0
  %531 = vmatpush.msra.mxu0 0.0
  %532 = vmatpush.msra.mxu0 0.0
  %533 = vmatpush.msra.mxu0 0.0
  %534 = vmatpush.msra.mxu0 0.0
  %535 = vmatpush.msra.mxu0 0.0
  %536 = vmatpush.msra.mxu0 0.0
  %537 = vmatpush.msra.mxu0 %v54
  %538 = vmatpush.msra.mxu0 %v53
  %539 = vmatpush.msra.mxu0 %v52
  %540 = vmatpush.msra.mxu0 %v51
  %541 = vmatmul.f32.gmra.mxu0 %v523
  %v542 = vpop.f32.mrf.mxu0
  %v543 = vadd.f32 0.0, %v542
  %544 = vdwg.mxu0
  %v545 = vadd.f32 %v176, %v543
  %v546 = vxor.u32 %v545, 2147483648
  %v547 = vmul.f32 %v546, 1.442695
  %v548 = vpow.pop %v547
  %v549 = vadd.f32 %v548, 1.0
  %v550 = vrcp.pop %v549
  %v551 = vmul.f32 %v549, %v550
  %v552 = vsub.f32 1.0, %v551
  %v553 = vmul.f32 %v550, %v552
  %v554 = vadd.f32 %v550, %v553
  %vm555 = vweird.f32 %v549
  %vm556 = vweird.f32 %v550
  %vm557 = vmor %vm555, %vm556
  %v558 = vsel %vm557, %v550, %v554
  %v559 = vand.u32 2147483647, %v549
  %vm560 = vcmp.eq.f32.partialorder %v559, 8.507059e+37
  %v561 = vand.u32 %v549, 2147483648
  %v562 = vor.u32 1.1754944e-38, %v561
  %v563 = vsel %vm560, %v562, %v558
  %v564 = vmul.f32 1.0, %v563
  %v565 = vtanh.pop %v545
  %567 = vrot.lane.b32.xlu0 %v521, 32
  %v568 = vpop.permute.xlu0 %567
  %v570 = vmul.f32 %v564, %v568
  %572 = vrot.lane.b32.xlu0 %v565, 64
  %v573 = vpop.permute.xlu0 %572
  %v575 = vmul.f32 %v564, %v573
  %577 = vrot.lane.b32.xlu0 %v575, 32
  %v578 = vpop.permute.xlu0 %577
  %v580 = vadd.f32 %v570, %v578
  %v581 = vtanh.pop %v580
  %583 = vrot.lane.b32.xlu0 %v581, 64
  %v584 = vpop.permute.xlu0 %583
  %v586 = vmul.f32 %v564, %v584
  %vm587 = vcmp.gt.s32.totalorder %v50, 4
  %v588 = vsel %vm587, 1, 0
  %589 = vset.pattern.permute.xlu0 0
  %590 = vperm.xlu0 %589, %v588
  %v591 = vpop.permute.xlu0 %590
  %vm592 = vcmp.eq.s32.totalorder %v591, 1
  %593 = vrot.lane.b32.xlu0 %v515, 96
  %v594 = vpop.permute.xlu0 %593
  %v596 = vsel %vm592, %v586, %v594
  %v597 = vsel %vm592, %v580, %v568
  %599 = vrot.lane.b32.xlu0 %v596, 32
  %v600 = vpop.permute.xlu0 %599
  %v601 = vsel %vm180, %v600, 0
  %603 = vmatpush.msra.mxu0 0.0
  %604 = vmatpush.msra.mxu0 0.0
  %605 = vmatpush.msra.mxu0 0.0
  %606 = vmatpush.msra.mxu0 0.0
  %607 = vmatpush.msra.mxu0 0.0
  %608 = vmatpush.msra.mxu0 0.0
  %609 = vmatpush.msra.mxu0 0.0
  %610 = vmatpush.msra.mxu0 0.0
  %611 = vmatpush.msra.mxu0 0.0
  %612 = vmatpush.msra.mxu0 0.0
  %613 = vmatpush.msra.mxu0 0.0
  %614 = vmatpush.msra.mxu0 0.0
  %615 = vmatpush.msra.mxu0 %v54
  %616 = vmatpush.msra.mxu0 %v53
  %617 = vmatpush.msra.mxu0 %v52
  %618 = vmatpush.msra.mxu0 %v51
  %619 = vmatmul.f32.gmra.mxu0 %v601
  %v620 = vpop.f32.mrf.mxu0
  %v621 = vadd.f32 0.0, %v620
  %622 = vdwg.mxu0
  %v624 = vrot.slane %v621, 6
  %v626 = vadd.f32 %v176, %v624
  %v627 = vxor.u32 %v626, 2147483648
  %v628 = vmul.f32 %v627, 1.442695
  %v629 = vpow.pop %v628
  %v630 = vadd.f32 %v629, 1.0
  %v631 = vrcp.pop %v630
  %v632 = vmul.f32 %v630, %v631
  %v633 = vsub.f32 1.0, %v632
  %v634 = vmul.f32 %v631, %v633
  %v635 = vadd.f32 %v631, %v634
  %vm636 = vweird.f32 %v630
  %vm637 = vweird.f32 %v631
  %vm638 = vmor %vm636, %vm637
  %v639 = vsel %vm638, %v631, %v635
  %v640 = vand.u32 2147483647, %v630
  %vm641 = vcmp.eq.f32.partialorder %v640, 8.507059e+37
  %v642 = vand.u32 %v630, 2147483648
  %v643 = vor.u32 1.1754944e-38, %v642
  %v644 = vsel %vm641, %v643, %v639
  %v645 = vmul.f32 1.0, %v644
  %v646 = vtanh.pop %v626
  %v648 = vrot.slane %v597, 6
  %v650 = vmul.f32 %v645, %v648
  %652 = vrot.lane.b32.xlu0 %v646, 64
  %v653 = vpop.permute.xlu0 %652
  %v655 = vmul.f32 %v645, %v653
  %657 = vrot.lane.b32.xlu0 %v655, 32
  %v658 = vpop.permute.xlu0 %657
  %v660 = vadd.f32 %v650, %v658
  %v661 = vtanh.pop %v660
  %663 = vrot.lane.b32.xlu0 %v661, 64
  %v664 = vpop.permute.xlu0 %663
  %v666 = vmul.f32 %v645, %v664
  %vm667 = vcmp.gt.s32.totalorder %v50, 5
  %v668 = vsel %vm667, 1, 0
  %669 = vset.pattern.permute.xlu0 0
  %670 = vperm.xlu0 %669, %v668
  %v671 = vpop.permute.xlu0 %670
  %vm672 = vcmp.eq.s32.totalorder %v671, 1
  %v674 = vrot.slane %v666, 2
  %675 = vrot.lane.b32.xlu0 %v674, 32
  %v676 = vpop.permute.xlu0 %675
  %v679 = vsel %vm672, %v676, %v600
  %v681 = vrot.slane %v660, 2
  %682 = vrot.lane.b32.xlu0 %v681, 96
  %v683 = vpop.permute.xlu0 %682
  %685 = vrot.lane.b32.xlu0 %v597, 96
  %v686 = vpop.permute.xlu0 %685
  %v688 = vsel %vm672, %v683, %v686
  %v690 = vsel %vm180, %v679, 0
  %692 = vmatpush.msra.mxu0 0.0
  %693 = vmatpush.msra.mxu0 0.0
  %694 = vmatpush.msra.mxu0 0.0
  %695 = vmatpush.msra.mxu0 0.0
  %696 = vmatpush.msra.mxu0 0.0
  %697 = vmatpush.msra.mxu0 0.0
  %698 = vmatpush.msra.mxu0 0.0
  %699 = vmatpush.msra.mxu0 0.0
  %700 = vmatpush.msra.mxu0 0.0
  %701 = vmatpush.msra.mxu0 0.0
  %702 = vmatpush.msra.mxu0 0.0
  %703 = vmatpush.msra.mxu0 0.0
  %704 = vmatpush.msra.mxu0 %v54
  %705 = vmatpush.msra.mxu0 %v53
  %706 = vmatpush.msra.mxu0 %v52
  %707 = vmatpush.msra.mxu0 %v51
  %708 = vmatmul.f32.gmra.mxu0 %v690
  %v709 = vpop.f32.mrf.mxu0
  %v710 = vadd.f32 0.0, %v709
  %711 = vdwg.mxu0
  %v713 = vrot.slane %v710, 4
  %v715 = vadd.f32 %v176, %v713
  %v716 = vxor.u32 %v715, 2147483648
  %v717 = vmul.f32 %v716, 1.442695
  %v718 = vpow.pop %v717
  %v719 = vadd.f32 %v718, 1.0
  %v720 = vrcp.pop %v719
  %v721 = vmul.f32 %v719, %v720
  %v722 = vsub.f32 1.0, %v721
  %v723 = vmul.f32 %v720, %v722
  %v724 = vadd.f32 %v720, %v723
  %vm725 = vweird.f32 %v719
  %vm726 = vweird.f32 %v720
  %vm727 = vmor %vm725, %vm726
  %v728 = vsel %vm727, %v720, %v724
  %v729 = vand.u32 2147483647, %v719
  %vm730 = vcmp.eq.f32.partialorder %v729, 8.507059e+37
  %v731 = vand.u32 %v719, 2147483648
  %v732 = vor.u32 1.1754944e-38, %v731
  %v733 = vsel %vm730, %v732, %v728
  %v734 = vmul.f32 1.0, %v733
  %v735 = vtanh.pop %v715
  %v737 = vrot.slane %v688, 4
  %738 = vrot.lane.b32.xlu0 %v737, 32
  %v739 = vpop.permute.xlu0 %738
  %v741 = vmul.f32 %v734, %v739
  %743 = vrot.lane.b32.xlu0 %v735, 64
  %v744 = vpop.permute.xlu0 %743
  %v746 = vmul.f32 %v734, %v744
  %748 = vrot.lane.b32.xlu0 %v746, 32
  %v749 = vpop.permute.xlu0 %748
  %v751 = vadd.f32 %v741, %v749
  %v752 = vtanh.pop %v751
  %754 = vrot.lane.b32.xlu0 %v752, 64
  %v755 = vpop.permute.xlu0 %754
  %v757 = vmul.f32 %v734, %v755
  %vm758 = vcmp.gt.s32.totalorder %v50, 6
  %v759 = vsel %vm758, 1, 0
  %760 = vset.pattern.permute.xlu0 0
  %761 = vperm.xlu0 %760, %v759
  %v762 = vpop.permute.xlu0 %761
  %vm763 = vcmp.eq.s32.totalorder %v762, 1
  %v765 = vrot.slane %v757, 4
  %766 = vrot.lane.b32.xlu0 %v765, 32
  %v767 = vpop.permute.xlu0 %766
  %v769 = vsel %vm763, %v767, %v679
  %v771 = vrot.slane %v751, 4
  %772 = vrot.lane.b32.xlu0 %v771, 96
  %v773 = vpop.permute.xlu0 %772
  %v775 = vsel %vm763, %v773, %v688
  %v777 = vsel %vm180, %v769, 0
  %779 = vmatpush.msra.mxu0 0.0
  %780 = vmatpush.msra.mxu0 0.0
  %781 = vmatpush.msra.mxu0 0.0
  %782 = vmatpush.msra.mxu0 0.0
  %783 = vmatpush.msra.mxu0 0.0
  %784 = vmatpush.msra.mxu0 0.0
  %785 = vmatpush.msra.mxu0 0.0
  %786 = vmatpush.msra.mxu0 0.0
  %787 = vmatpush.msra.mxu0 0.0
  %788 = vmatpush.msra.mxu0 0.0
  %789 = vmatpush.msra.mxu0 0.0
  %790 = vmatpush.msra.mxu0 0.0
  %791 = vmatpush.msra.mxu0 %v54
  %792 = vmatpush.msra.mxu0 %v53
  %793 = vmatpush.msra.mxu0 %v52
  %794 = vmatpush.msra.mxu0 %v51
  %795 = vmatmul.f32.gmra.mxu0 %v777
  %v796 = vpop.f32.mrf.mxu0
  %v797 = vadd.f32 0.0, %v796
  %798 = vdwg.mxu0
  %v800 = vrot.slane %v797, 2
  %v802 = vadd.f32 %v176, %v800
  %v803 = vxor.u32 %v802, 2147483648
  %v804 = vmul.f32 %v803, 1.442695
  %v805 = vpow.pop %v804
  %v806 = vadd.f32 %v805, 1.0
  %v807 = vrcp.pop %v806
  %v808 = vmul.f32 %v806, %v807
  %v809 = vsub.f32 1.0, %v808
  %v810 = vmul.f32 %v807, %v809
  %v811 = vadd.f32 %v807, %v810
  %vm812 = vweird.f32 %v806
  %vm813 = vweird.f32 %v807
  %vm814 = vmor %vm812, %vm813
  %v815 = vsel %vm814, %v807, %v811
  %v816 = vand.u32 2147483647, %v806
  %vm817 = vcmp.eq.f32.partialorder %v816, 8.507059e+37
  %v818 = vand.u32 %v806, 2147483648
  %v819 = vor.u32 1.1754944e-38, %v818
  %v820 = vsel %vm817, %v819, %v815
  %v821 = vmul.f32 1.0, %v820
  %v822 = vtanh.pop %v802
  %v824 = vrot.slane %v775, 2
  %825 = vrot.lane.b32.xlu0 %v824, 32
  %v826 = vpop.permute.xlu0 %825
  %v828 = vmul.f32 %v821, %v826
  %830 = vrot.lane.b32.xlu0 %v822, 64
  %v831 = vpop.permute.xlu0 %830
  %v833 = vmul.f32 %v821, %v831
  %835 = vrot.lane.b32.xlu0 %v833, 32
  %v836 = vpop.permute.xlu0 %835
  %v838 = vadd.f32 %v828, %v836
  %v839 = vtanh.pop %v838
  %841 = vrot.lane.b32.xlu0 %v839, 64
  %v842 = vpop.permute.xlu0 %841
  %v844 = vmul.f32 %v821, %v842
  %vm845 = vcmp.gt.s32.totalorder %v50, 7
  %v846 = vsel %vm845, 1, 0
  %847 = vset.pattern.permute.xlu0 0
  %848 = vperm.xlu0 %847, %v846
  %v849 = vpop.permute.xlu0 %848
  %vm850 = vcmp.eq.s32.totalorder %v849, 1
  %v852 = vrot.slane %v844, 6
  %853 = vrot.lane.b32.xlu0 %v852, 32
  %v854 = vpop.permute.xlu0 %853
  %v856 = vsel %vm850, %v854, %v769
  %v858 = vrot.slane %v838, 6
  %859 = vrot.lane.b32.xlu0 %v858, 96
  %v860 = vpop.permute.xlu0 %859
  %v862 = vsel %vm850, %v860, %v775
  %v863 = vld [vmem:[%s11] sm:$0xff]
  %v864 = vld [vmem:[%s11 + $0x8] sm:$0xff]
  %v865 = vld [vmem:[%s11 + $0x10] sm:$0xff]
  %v866 = vld [vmem:[%s11 + $0x18] sm:$0xff]
  %v867 = vld [vmem:[%s12] sm:$0x1]
  %v869 = vperm.slane %v867, 0
  %v872 = vsel %vm180, %v856, 0
  %874 = vmatpush.msra.mxu0 0.0
  %875 = vmatpush.msra.mxu0 0.0
  %876 = vmatpush.msra.mxu0 0.0
  %877 = vmatpush.msra.mxu0 0.0
  %878 = vmatpush.msra.mxu0 0.0
  %879 = vmatpush.msra.mxu0 0.0
  %880 = vmatpush.msra.mxu0 0.0
  %881 = vmatpush.msra.mxu0 0.0
  %882 = vmatpush.msra.mxu0 0.0
  %883 = vmatpush.msra.mxu0 0.0
  %884 = vmatpush.msra.mxu0 0.0
  %885 = vmatpush.msra.mxu0 0.0
  %886 = vmatpush.msra.mxu0 %v866
  %887 = vmatpush.msra.mxu0 %v865
  %888 = vmatpush.msra.mxu0 %v864
  %889 = vmatpush.msra.mxu0 %v863
  %890 = vmatmul.f32.gmra.mxu0 %v872
  %v891 = vpop.f32.mrf.mxu0
  %v892 = vadd.f32 %v869, %v891
  %893 = vdwg.mxu0
  %v894 = vmax.f32 %v892, 0.0
  %v895 = vld [vmem:[%s13] sm:$0xff]
  %v896 = vld [vmem:[%s13 + $0x8] sm:$0xff]
  %v897 = vld [vmem:[%s13 + $0x10] sm:$0xff]
  %v898 = vld [vmem:[%s13 + $0x18] sm:$0xff]
  %v899 = vld [vmem:[%s13 + $0x20] sm:$0xff]
  %v900 = vld [vmem:[%s13 + $0x28] sm:$0xff]
  %v901 = vld [vmem:[%s13 + $0x30] sm:$0xff]
  %v902 = vld [vmem:[%s13 + $0x38] sm:$0xff]
  %v903 = vld [vmem:[%s14] sm:$0x1]
  %v905 = vperm.slane %v903, 0
  %v908 = vsel %vm107, %v894, 0
  %910 = vmatpush.msra.mxu0 0.0
  %911 = vmatpush.msra.mxu0 0.0
  %912 = vmatpush.msra.mxu0 0.0
  %913 = vmatpush.msra.mxu0 0.0
  %914 = vmatpush.msra.mxu0 0.0
  %915 = vmatpush.msra.mxu0 0.0
  %916 = vmatpush.msra.mxu0 0.0
  %917 = vmatpush.msra.mxu0 0.0
  %918 = vmatpush.msra.mxu0 %v902
  %919 = vmatpush.msra.mxu0 %v901
  %920 = vmatpush.msra.mxu0 %v900
  %921 = vmatpush.msra.mxu0 %v899
  %922 = vmatpush.msra.mxu0 %v898
  %923 = vmatpush.msra.mxu0 %v897
  %924 = vmatpush.msra.mxu0 %v896
  %925 = vmatpush.msra.mxu0 %v895
  %926 = vmatmul.f32.gmra.mxu0 %v908
  %v927 = vpop.f32.mrf.mxu0
  %v928 = vadd.f32 %v905, %v927
  %929 = vdwg.mxu0
  %930 = vrot.lane.b32.xlu0 %v856, 64
  %v931 = vpop.permute.xlu0 %930
  %934 = vrot.lane.b32.xlu0 %v862, 96
  %v935 = vpop.permute.xlu0 %934
  %v937 = vsel %vm107, %v928, %v931
  %vm938 = vcmask 785408
  %v939 = vsel %vm938, %v937, %v935
  %940 = vst [vmem:[%s15] sm:$0x3] %v939
  // Predicated region
  $region62: #{policy_value_lstm_forward.1} parent=0 // pred_check
    _
  $region63: #{policy_value_lstm_forward.1} parent=0 // pred_check_branch
    %942 = sbr.rel (0) target = $region65
  $region64: #{policy_value_lstm_forward.1} parent=0 // pred_region
    _
  $region65: #{policy_value_lstm_forward.1} parent=0 // pred_fallthru
    _
  // Predicated region
  $region66: #{policy_value_lstm_forward.1} parent=0 // pred_check
    _
  $region67: #{policy_value_lstm_forward.1} parent=0 // pred_check_branch
    %944 = sbr.rel (0) target = $region69
  $region68: #{policy_value_lstm_forward.1} parent=0 // pred_region
    _
  $region69: #{policy_value_lstm_forward.1} parent=0 // pred_fallthru
    _

</llo_original>
